<compile_context>
chip_gen: v6e
topology: v6e:2x2x1
jax: 0.10.0
libtpu: 0.0.40
codegen_flags: <defaults>
</compile_context>

<pallas_src>
import functools
import math

import jax
import jax.numpy as jnp
from jax import lax
from jax.experimental import pallas as pl
from jax.experimental.pallas import tpu as pltpu


# ---------------------------------------------------------------------------
# Kernels
# ---------------------------------------------------------------------------

def _permute_kernel(x_ref, p_ref, o_ref, *, precision):
    """out = x @ P in one shot (P fully resident, grid = batch tiles only)."""
    o_ref[...] = jnp.dot(
        x_ref[...], p_ref[...],
        preferred_element_type=jnp.float32,
        precision=precision,
    ).astype(o_ref.dtype)


def _permute_kernel_acc(x_ref, p_ref, o_ref, acc_ref, *, precision):
    """out = x @ P with tiled feature axes; grid axis 2 is the K reduction."""
    k = pl.program_id(2)

    @pl.when(k == 0)
    def _():
        acc_ref[...] = jnp.zeros_like(acc_ref)

    acc_ref[...] += jnp.dot(
        x_ref[...], p_ref[...],
        preferred_element_type=jnp.float32,
        precision=precision,
    )

    @pl.when(k == pl.num_programs(2) - 1)
    def _():
        o_ref[...] = acc_ref[...].astype(o_ref.dtype)


# ---------------------------------------------------------------------------
# Wrapper
# ---------------------------------------------------------------------------

_VMEM_LIMIT_BYTES = 48 * 1024 * 1024    # <= v7x 64 MiB physical; >> v5e 16 MiB default
_VMEM_TARGET_BYTES = 40 * 1024 * 1024   # per-step working-set target (Mosaic slack left)
_P_RESIDENT_CAP = 16 * 1024 * 1024      # max *double-buffered* P kept fully resident
_MAX_BATCH_TILE = 2048


def _feature_tile(d):
    """Largest 128-multiple tile that exactly divides d (no ragged K blocks)."""
    for t in (1024, 512, 256, 128):
        if d % t == 0:
            return t
    # TODO(synk): ragged D >= 128 keeps a monolithic P; padding P/out with
    # identity columns to the next 128 multiple would keep stores unmasked.
    return d


def _choose_fold(batch, dim):
    """k rows folded into the lane axis so the output last dim is >= 128."""
    if dim >= 128 or 128 % dim != 0:
        # TODO(synk): D < 128 that does not divide 128 still gets masked stores.
        return 1
    k = 128 // dim
    return k if batch % k == 0 else 1


def permutation_matrix(index, dtype=jnp.float32):
    """P with P[j, i] = 1 iff index[i] == j, so x @ P == x[:, index]."""
    d = index.shape[0]
    return jnp.zeros((d, d), dtype).at[index, jnp.arange(d)].set(1)


@functools.partial(jax.jit, static_argnames=("fold",))
def shuffle_pallas(x, perm_eff, *, fold=1):
    """Permute the feature axis of x:(B, D).  `perm_eff` is the (fold*D, fold*D)
    0/1 matrix such that x.reshape(B//fold, fold*D) @ perm_eff is the gather."""
    assert x.ndim == 2, "ShuffleModule forward expects (batch, dim) input"
    B, D = x.shape
    assert fold >= 1 and B % fold == 0

    xf = x.reshape(B // fold, fold * D) if fold > 1 else x
    Bf, De = xf.shape
    assert perm_eff.shape == (De, De)

    in_bytes = xf.dtype.itemsize
    p_bytes = perm_eff.dtype.itemsize

    # f32 inputs: request full-precision MXU passes so x @ P stays an exact
    # gather (bf16/f16 inputs are exact at default precision with a 0/1 P).
    precision = (lax.Precision.HIGHEST if xf.dtype == jnp.float32
                 else lax.Precision.DEFAULT)

    # ---- feature tiling: keep P fully resident unless it is too big --------
    if 2 * De * De * p_bytes <= _P_RESIDENT_CAP:     # 2x: default double buffering
        tk = tn = De
    else:
        tk = tn = _feature_tile(De)
    k_steps = De // tk
    n_steps = De // tn
    p_resident = 2 * tk * tn * p_bytes               # budget 2 buffers for P

    # ---- batch tiling -------------------------------------------------------
    # Per-row bytes: double-buffered x tile + double-buffered out tile (+ acc).
    per_row = 2 * tk * in_bytes + 2 * tn * in_bytes + (4 * tn if k_steps > 1 else 0)
    tile_budget = max(_VMEM_TARGET_BYTES - p_resident, 4 * 1024 * 1024)
    tb = min(_MAX_BATCH_TILE, max(8, tile_budget // per_row))
    if Bf < 16:
        tb = Bf                          # one full-array block (any Bf allowed)
    else:
        tb = min(tb, pl.cdiv(Bf, 2))     # >= 2 blocks so v7x megacore uses 2 TCs
        tb = max(8, (tb // 8) * 8)       # aligned second-minor block dim
    nb_b = pl.cdiv(Bf, tb)

    out_shape = jax.ShapeDtypeStruct((Bf, De), xf.dtype)

    if k_steps == 1:
        call = pl.pallas_call(
            functools.partial(_permute_kernel, precision=precision),
            out_shape=out_shape,
            grid_spec=pltpu.PrefetchScalarGridSpec(
                num_scalar_prefetch=0,
                grid=(nb_b,),
                in_specs=[
                    pl.BlockSpec((tb, De), lambda i: (i, 0)),  # batch tile of x
                    pl.BlockSpec((De, De), lambda i: (0, 0)),  # P stays resident
                ],
                out_specs=pl.BlockSpec((tb, De), lambda i: (i, 0)),
            ),
            compiler_params=pltpu.CompilerParams(
                dimension_semantics=("parallel",),
                vmem_limit_bytes=_VMEM_LIMIT_BYTES,
            ),
        )
    else:
        call = pl.pallas_call(
            functools.partial(_permute_kernel_acc, precision=precision),
            out_shape=out_shape,
            grid_spec=pltpu.PrefetchScalarGridSpec(
                num_scalar_prefetch=0,
                grid=(nb_b, n_steps, k_steps),
                in_specs=[
                    pl.BlockSpec((tb, tk), lambda i, j, k: (i, k)),
                    pl.BlockSpec((tk, tn), lambda i, j, k: (k, j)),
                ],
                out_specs=pl.BlockSpec((tb, tn), lambda i, j, k: (i, j)),
                scratch_shapes=[pltpu.VMEM((tb, tn), jnp.float32)],
            ),
            compiler_params=pltpu.CompilerParams(
                dimension_semantics=("parallel", "parallel", "arbitrary"),
                vmem_limit_bytes=_VMEM_LIMIT_BYTES,
            ),
        )

    out = call(xf, perm_eff)
    return out.reshape(B, D) if fold > 1 else out


# ---------------------------------------------------------------------------
# Module
# ---------------------------------------------------------------------------

class ShuffleModule:
    """JAX/Pallas port of the PyTorch ShuffleModule (fixed feature permutation)."""

    def __init__(self, dim, key):
        self.dim = dim
        self.index = jax.random.permutation(key, dim)        # torch.randperm(dim)
        self.inverse_index = jnp.argsort(self.index)
        self._mats = {}   # (forward, fold, dtype name) -> effective 0/1 matrix

    def _perm_mat(self, forward, fold, dtype):
        cache_key = (bool(forward), int(fold), jnp.dtype(dtype).name)
        mat = self._mats.get(cache_key)
        if mat is None:
            idx = self.index if forward else self.inverse_index
            mat = permutation_matrix(idx, dtype)
            if fold > 1:
                # Block-diagonal kron(I_fold, P): `fold` batch rows are packed
                # into the lane axis so the output stays >= 128 lanes wide.
                mat = jnp.kron(jnp.eye(fold, dtype=dtype), mat)
            self._mats[cache_key] = mat
        return mat

    def _apply(self, x, forward):
        assert x.ndim == 2 and x.shape[1] == self.dim
        fold = _choose_fold(x.shape[0], self.dim)
        # bf16/f16 inputs use a same-dtype P (exact for 0/1, native MXU);
        # everything else goes through an f32 P.
        if x.dtype == jnp.bfloat16 or x.dtype == jnp.float16:
            p_dtype = x.dtype
        else:
            p_dtype = jnp.float32
        return shuffle_pallas(x, self._perm_mat(forward, fold, p_dtype), fold=fold)

    def forward(self, x, log_p0=0, log_det_J=0):
        return self._apply(x, forward=True), log_p0, log_det_J

    def inverse(self, y, **kwargs):
        return self._apply(y, forward=False)


# ---------------------------------------------------------------------------
# Self-test
# ---------------------------------------------------------------------------

if __name__ == "__main__":
    key = jax.random.PRNGKey(0)
    k_perm, k_x1, k_x2, k_x3 = jax.random.split(key, 4)

    # Case 1: small flow-style shape (batch=8, dim=32).  dim < 128, so 4 rows
    # are folded into the lane axis (output lanes = 128, single block).
    # Inputs are snapped to bf16-representable values so the reference check is
    # exact regardless of the MXU pass count.
    dim = 32
    module = ShuffleModule(dim, k_perm)
    x = jax.random.normal(k_x1, (8, dim), dtype=jnp.float32)
    x = x.astype(jnp.bfloat16).astype(jnp.float32)
    y, log_p0, log_det_J = module.forward(x)
    jax.block_until_ready(y)
    assert y.shape == x.shape and y.dtype == x.dtype
    assert log_p0 == 0 and log_det_J == 0
    assert jnp.allclose(y, x[:, module.index], atol=1e-6, rtol=1e-6)

    x_back = module.inverse(y)
    jax.block_until_ready(x_back)
    assert jnp.allclose(x_back, x, atol=1e-6, rtol=1e-6)

    # Case 2: larger batch -> folded batch of 16 rows -> >= 2 "parallel" batch
    # blocks (exercises the multi-block / megacore path).
    x2 = jax.random.normal(k_x2, (64, dim), dtype=jnp.float32)
    x2 = x2.astype(jnp.bfloat16).astype(jnp.float32)
    y2, _, _ = module.forward(x2)
    jax.block_until_ready(y2)
    assert jnp.allclose(y2, x2[:, module.index], atol=1e-6, rtol=1e-6)

    # Case 3: bf16 input with dim=128 -> no fold, bf16 P fed natively to the MXU.
    module128 = ShuffleModule(128, k_perm)
    x3 = jax.random.normal(k_x3, (4, 128), dtype=jnp.bfloat16)
    y3, _, _ = module128.forward(x3)
    jax.block_until_ready(y3)
    assert jnp.allclose(y3.astype(jnp.float32),
                        x3[:, module128.index].astype(jnp.float32),
                        atol=1e-2, rtol=1e-2)

    print("KERNEL_OK")
</pallas_src>

<mosaic_0001>
module attributes {stable_mosaic.version = 11 : i64} {
  func.func @_permute_kernel(%arg0: i32, %arg1: memref<2x128xf32, #tpu.memory_space<vmem>>, %arg2: memref<128x128xf32, #tpu.memory_space<vmem>>, %arg3: memref<2x128xf32, #tpu.memory_space<vmem>>) attributes {dimension_semantics = [#tpu.dimension_semantics<parallel>], iteration_bounds = array<i64: 1>, scalar_prefetch = 0 : i64, scratch_operands = 0 : i64, tpu.core_type = #tpu.core_type<tc>, window_params = [{transform_indices = @transform_0, window_bounds = array<i64: 2, 128>}, {pipeline_mode = #tpu.pipeline_mode<synchronous>, transform_indices = @transform_1, window_bounds = array<i64: 128, 128>}, {transform_indices = @transform_2, window_bounds = array<i64: 2, 128>}]} {
    %c0 = arith.constant 0 : index
    %c0_0 = arith.constant 0 : index
    %0 = vector.load %arg1[%c0, %c0_0] : memref<2x128xf32, #tpu.memory_space<vmem>>, vector<2x128xf32>
    %c0_1 = arith.constant 0 : index
    %c0_2 = arith.constant 0 : index
    %1 = vector.load %arg2[%c0_1, %c0_2] : memref<128x128xf32, #tpu.memory_space<vmem>>, vector<128x128xf32>
    %cst = arith.constant dense<0.000000e+00> : vector<2x128xf32>
    %2 = tpu.matmul %0, %1, %cst {dimension_numbers = #tpu.dot_dimension_numbers<[1], [0], [0], [1], [0, 0, 1, 1], [], []>, precision = #tpu.contract_precision<fp32>} : vector<2x128xf32>, vector<128x128xf32>, vector<2x128xf32> -> vector<2x128xf32>
    %c0_3 = arith.constant 0 : index
    %c0_4 = arith.constant 0 : index
    %3 = vector.load %arg3[%c0_3, %c0_4] : memref<2x128xf32, #tpu.memory_space<vmem>>, vector<2x128xf32>
    tpu.vector_store %arg3[%c0_3, %c0_4], %2 {strides = array<i32>} : memref<2x128xf32, #tpu.memory_space<vmem>>, vector<2x128xf32>,
    return
  }
  func.func @transform_0(%arg0: i32) -> (i32, i32) {
    %c0_i32 = arith.constant 0 : i32
    %c0_i32_0 = arith.constant 0 : i32
    return %arg0, %c0_i32 : i32, i32
  }
  func.func @transform_1(%arg0: i32) -> (i32, i32) {
    %c0_i32 = arith.constant 0 : i32
    %c0_i32_0 = arith.constant 0 : i32
    %c0_i32_1 = arith.constant 0 : i32
    return %c0_i32, %c0_i32_0 : i32, i32
  }
  func.func @transform_2(%arg0: i32) -> (i32, i32) {
    %c0_i32 = arith.constant 0 : i32
    %c0_i32_0 = arith.constant 0 : i32
    return %arg0, %c0_i32 : i32, i32
  }
}

</mosaic_0001>

<llo_original>
// kernel: shuffle_pallas.1
$region0: #{shuffle_pallas.1}
  #allocation0 [shape = 'u32[]', space=smem, size = 0x4, offset = 0x4, fixed_abs, tag = 'smem constant byte address 0x4 - core index']
  #allocation1 [shape = 'u32[144,128]{1,0:T(1,128)}', space=vmem, size = 0x12000, scoped, tag = 'internal scratch']
  %s0 = inlined_call_operand.vmem [shape: f32[2,128], index: 0, kind: input, shape index: {}]
  %s1 = inlined_call_operand.hbm [shape: f32[128,128], index: 1, kind: input, shape index: {}]
  %s2 = inlined_call_operand.vmem [shape: f32[2,128], index: 2, kind: output, shape index: {}]
  %s3 = sld [smem:[#allocation0]]
  $region22: #{shuffle_pallas.1} parent=0
    _
  %s5 = ssub.s32 1, %s3
  %s6 = scalar_select 0, %s5, %s3
  $region1: #{shuffle_pallas.1} parent=0
    #allocation2 [shape = 'u8[65536]{0}', space=vmem, size = 0x10000, scoped, tag = 'input window, operand 1, single buffered']
    #allocation3 [shape = 's32[1]{0}', space=sflag, size = 0x4, scoped, tag = 'scoped memory for shuffle_pallas.1']
    %7 = vsyncpa [#allocation3], 0
    // Predicated region
    $region2: #{shuffle_pallas.1} parent=1 // pred_check
      _
    $region3: #{shuffle_pallas.1} parent=1 // pred_check_branch
      %9 = sbr.rel (0) target = $region5
    $region4: #{shuffle_pallas.1} parent=1 // pred_region
      _
    $region5: #{shuffle_pallas.1} parent=1 // pred_fallthru
      _
    // Predicated region
    $region6: #{shuffle_pallas.1} parent=1 // pred_check
      _
    $region7: #{shuffle_pallas.1} parent=1 // pred_check_branch
      %11 = sbr.rel (0) target = $region9
    $region8: #{shuffle_pallas.1} parent=1 // pred_region
      %s13 = ssub.s32 2048, 2048
      %14 = vsyncadd [#allocation3], %s13
      %s15 = sshll.u32 [#allocation2], 4
      %s16 = int_to_ptr.vmem [resolvable:$true] %s15
      %21 = dma.hbm_to_vmem [thread:$0]  %s1, 2048, %s16, [#allocation3], 128, 128, 8
    $region9: #{shuffle_pallas.1} parent=1 // pred_fallthru
      _
    // Predicated region
    $region10: #{shuffle_pallas.1} parent=1 // pred_check
      _
    $region11: #{shuffle_pallas.1} parent=1 // pred_check_branch
      %23 = sbr.rel (0) target = $region13
    $region12: #{shuffle_pallas.1} parent=1 // pred_region
      %24 = dma.done [#allocation3], 2048
    $region13: #{shuffle_pallas.1} parent=1 // pred_fallthru
      _
    %v25 = vld [vmem:[%s0] sm:$0x3]
    %v26 = vld [vmem:[#allocation2] sm:$0xff]
    %v27 = vld [vmem:[#allocation2 + $0x8] sm:$0xff]
    %v28 = vld [vmem:[#allocation2 + $0x10] sm:$0xff]
    %v29 = vld [vmem:[#allocation2 + $0x18] sm:$0xff]
    %v30 = vld [vmem:[#allocation2 + $0x20] sm:$0xff]
    %v31 = vld [vmem:[#allocation2 + $0x28] sm:$0xff]
    %v32 = vld [vmem:[#allocation2 + $0x30] sm:$0xff]
    %v33 = vld [vmem:[#allocation2 + $0x38] sm:$0xff]
    %v34 = vld [vmem:[#allocation2 + $0x40] sm:$0xff]
    %v35 = vld [vmem:[#allocation2 + $0x48] sm:$0xff]
    %v36 = vld [vmem:[#allocation2 + $0x50] sm:$0xff]
    %v37 = vld [vmem:[#allocation2 + $0x58] sm:$0xff]
    %v38 = vld [vmem:[#allocation2 + $0x60] sm:$0xff]
    %v39 = vld [vmem:[#allocation2 + $0x68] sm:$0xff]
    %v40 = vld [vmem:[#allocation2 + $0x70] sm:$0xff]
    %v41 = vld [vmem:[#allocation2 + $0x78] sm:$0xff]
    %42 = vmatprep.subr.mxu0 0.0
    %v43 = vand.u32 %v41, 4294901760
    %44 = vmatpush1.msra.mxu0 %v43
    %45 = vmatprep.subr.mxu0 0.0
    %v46 = vand.u32 %v40, 4294901760
    %47 = vmatpush1.msra.mxu0 %v46
    %48 = vmatprep.subr.mxu0 0.0
    %v49 = vand.u32 %v39, 4294901760
    %50 = vmatpush1.msra.mxu0 %v49
    %51 = vmatprep.subr.mxu0 0.0
    %v52 = vand.u32 %v38, 4294901760
    %53 = vmatpush1.msra.mxu0 %v52
    %54 = vmatprep.subr.mxu0 0.0
    %v55 = vand.u32 %v37, 4294901760
    %56 = vmatpush1.msra.mxu0 %v55
    %57 = vmatprep.subr.mxu0 0.0
    %v58 = vand.u32 %v36, 4294901760
    %59 = vmatpush1.msra.mxu0 %v58
    %60 = vmatprep.subr.mxu0 0.0
    %v61 = vand.u32 %v35, 4294901760
    %62 = vmatpush1.msra.mxu0 %v61
    %63 = vmatprep.subr.mxu0 0.0
    %v64 = vand.u32 %v34, 4294901760
    %65 = vmatpush1.msra.mxu0 %v64
    %66 = vmatprep.subr.mxu0 0.0
    %v67 = vand.u32 %v33, 4294901760
    %68 = vmatpush1.msra.mxu0 %v67
    %69 = vmatprep.subr.mxu0 0.0
    %v70 = vand.u32 %v32, 4294901760
    %71 = vmatpush1.msra.mxu0 %v70
    %72 = vmatprep.subr.mxu0 0.0
    %v73 = vand.u32 %v31, 4294901760
    %74 = vmatpush1.msra.mxu0 %v73
    %75 = vmatprep.subr.mxu0 0.0
    %v76 = vand.u32 %v30, 4294901760
    %77 = vmatpush1.msra.mxu0 %v76
    %78 = vmatprep.subr.mxu0 0.0
    %v79 = vand.u32 %v29, 4294901760
    %80 = vmatpush1.msra.mxu0 %v79
    %81 = vmatprep.subr.mxu0 0.0
    %v82 = vand.u32 %v28, 4294901760
    %83 = vmatpush1.msra.mxu0 %v82
    %84 = vmatprep.subr.mxu0 0.0
    %v85 = vand.u32 %v27, 4294901760
    %86 = vmatpush1.msra.mxu0 %v85
    %87 = vmatprep.subr.mxu0 0.0
    %v88 = vand.u32 %v26, 4294901760
    %89 = vmatpush1.msra.mxu0 %v88
    %90 = vmatprep.subr.mxu0 0.0
    %91 = vmatpush2.msra.mxu0 0.0
    %92 = vmatprep.subr.mxu0 0.0
    %93 = vmatpush2.msra.mxu0 0.0
    %94 = vmatprep.subr.mxu0 0.0
    %95 = vmatpush2.msra.mxu0 0.0
    %96 = vmatprep.subr.mxu0 0.0
    %97 = vmatpush2.msra.mxu0 0.0
    %98 = vmatprep.subr.mxu0 0.0
    %99 = vmatpush2.msra.mxu0 0.0
    %100 = vmatprep.subr.mxu0 0.0
    %101 = vmatpush2.msra.mxu0 0.0
    %102 = vmatprep.subr.mxu0 0.0
    %103 = vmatpush2.msra.mxu0 0.0
    %104 = vmatprep.subr.mxu0 0.0
    %105 = vmatpush2.msra.mxu0 0.0
    %106 = vmatprep.subr.mxu0 0.0
    %107 = vmatpush2.msra.mxu0 0.0
    %108 = vmatprep.subr.mxu0 0.0
    %109 = vmatpush2.msra.mxu0 0.0
    %110 = vmatprep.subr.mxu0 0.0
    %111 = vmatpush2.msra.mxu0 0.0
    %112 = vmatprep.subr.mxu0 0.0
    %113 = vmatpush2.msra.mxu0 0.0
    %114 = vmatprep.subr.mxu0 0.0
    %115 = vmatpush2.msra.mxu0 0.0
    %116 = vmatprep.subr.mxu0 0.0
    %117 = vmatpush2.msra.mxu0 0.0
    %118 = vmatprep.subr.mxu0 0.0
    %119 = vmatpush2.msra.mxu0 0.0
    %120 = vmatprep.subr.mxu0 0.0
    %121 = vmatpush2.msra.mxu0 0.0
    %122 = vmatprep.mubr.f32.mxu0 0.0
    %v123 = vand.u32 %v25, 4294901760
    %v124 = vsub.f32 %v25, %v123
    %v125 = vand.u32 %v124, 4294901760
    %v126 = vsub.f32 %v124, %v125
    %v127 = vand.u32 %v126, 4294901760
    %128 = vmatmul.mubr.f32.gmra.mxu0 %v127
    %v129 = vpop.f32.mrf.mxu0
    %v130 = vadd.f32 0.0, %v129
    %v131 = vpop.f32.mrf.mxu0
    %132 = vdwg.mxu0
    %133 = vmatprep.subr.mxu0 0.0
    %v134 = vand.u32 %v41, 4294901760
    %v135 = vsub.f32 %v41, %v134
    %v136 = vand.u32 %v135, 4294901760
    %v137 = vsub.f32 %v135, %v136
    %v138 = vand.u32 %v137, 4294901760
    %139 = vmatpush1.msra.mxu0 %v138
    %140 = vmatprep.subr.mxu0 0.0
    %v141 = vand.u32 %v40, 4294901760
    %v142 = vsub.f32 %v40, %v141
    %v143 = vand.u32 %v142, 4294901760
    %v144 = vsub.f32 %v142, %v143
    %v145 = vand.u32 %v144, 4294901760
    %146 = vmatpush1.msra.mxu0 %v145
    %147 = vmatprep.subr.mxu0 0.0
    %v148 = vand.u32 %v39, 4294901760
    %v149 = vsub.f32 %v39, %v148
    %v150 = vand.u32 %v149, 4294901760
    %v151 = vsub.f32 %v149, %v150
    %v152 = vand.u32 %v151, 4294901760
    %153 = vmatpush1.msra.mxu0 %v152
    %154 = vmatprep.subr.mxu0 0.0
    %v155 = vand.u32 %v38, 4294901760
    %v156 = vsub.f32 %v38, %v155
    %v157 = vand.u32 %v156, 4294901760
    %v158 = vsub.f32 %v156, %v157
    %v159 = vand.u32 %v158, 4294901760
    %160 = vmatpush1.msra.mxu0 %v159
    %161 = vmatprep.subr.mxu0 0.0
    %v162 = vand.u32 %v37, 4294901760
    %v163 = vsub.f32 %v37, %v162
    %v164 = vand.u32 %v163, 4294901760
    %v165 = vsub.f32 %v163, %v164
    %v166 = vand.u32 %v165, 4294901760
    %167 = vmatpush1.msra.mxu0 %v166
    %168 = vmatprep.subr.mxu0 0.0
    %v169 = vand.u32 %v36, 4294901760
    %v170 = vsub.f32 %v36, %v169
    %v171 = vand.u32 %v170, 4294901760
    %v172 = vsub.f32 %v170, %v171
    %v173 = vand.u32 %v172, 4294901760
    %174 = vmatpush1.msra.mxu0 %v173
    %175 = vmatprep.subr.mxu0 0.0
    %v176 = vand.u32 %v35, 4294901760
    %v177 = vsub.f32 %v35, %v176
    %v178 = vand.u32 %v177, 4294901760
    %v179 = vsub.f32 %v177, %v178
    %v180 = vand.u32 %v179, 4294901760
    %181 = vmatpush1.msra.mxu0 %v180
    %182 = vmatprep.subr.mxu0 0.0
    %v183 = vand.u32 %v34, 4294901760
    %v184 = vsub.f32 %v34, %v183
    %v185 = vand.u32 %v184, 4294901760
    %v186 = vsub.f32 %v184, %v185
    %v187 = vand.u32 %v186, 4294901760
    %188 = vmatpush1.msra.mxu0 %v187
    %189 = vmatprep.subr.mxu0 0.0
    %v190 = vand.u32 %v33, 4294901760
    %v191 = vsub.f32 %v33, %v190
    %v192 = vand.u32 %v191, 4294901760
    %v193 = vsub.f32 %v191, %v192
    %v194 = vand.u32 %v193, 4294901760
    %195 = vmatpush1.msra.mxu0 %v194
    %196 = vmatprep.subr.mxu0 0.0
    %v197 = vand.u32 %v32, 4294901760
    %v198 = vsub.f32 %v32, %v197
    %v199 = vand.u32 %v198, 4294901760
    %v200 = vsub.f32 %v198, %v199
    %v201 = vand.u32 %v200, 4294901760
    %202 = vmatpush1.msra.mxu0 %v201
    %203 = vmatprep.subr.mxu0 0.0
    %v204 = vand.u32 %v31, 4294901760
    %v205 = vsub.f32 %v31, %v204
    %v206 = vand.u32 %v205, 4294901760
    %v207 = vsub.f32 %v205, %v206
    %v208 = vand.u32 %v207, 4294901760
    %209 = vmatpush1.msra.mxu0 %v208
    %210 = vmatprep.subr.mxu0 0.0
    %v211 = vand.u32 %v30, 4294901760
    %v212 = vsub.f32 %v30, %v211
    %v213 = vand.u32 %v212, 4294901760
    %v214 = vsub.f32 %v212, %v213
    %v215 = vand.u32 %v214, 4294901760
    %216 = vmatpush1.msra.mxu0 %v215
    %217 = vmatprep.subr.mxu0 0.0
    %v218 = vand.u32 %v29, 4294901760
    %v219 = vsub.f32 %v29, %v218
    %v220 = vand.u32 %v219, 4294901760
    %v221 = vsub.f32 %v219, %v220
    %v222 = vand.u32 %v221, 4294901760
    %223 = vmatpush1.msra.mxu0 %v222
    %224 = vmatprep.subr.mxu0 0.0
    %v225 = vand.u32 %v28, 4294901760
    %v226 = vsub.f32 %v28, %v225
    %v227 = vand.u32 %v226, 4294901760
    %v228 = vsub.f32 %v226, %v227
    %v229 = vand.u32 %v228, 4294901760
    %230 = vmatpush1.msra.mxu0 %v229
    %231 = vmatprep.subr.mxu0 0.0
    %v232 = vand.u32 %v27, 4294901760
    %v233 = vsub.f32 %v27, %v232
    %v234 = vand.u32 %v233, 4294901760
    %v235 = vsub.f32 %v233, %v234
    %v236 = vand.u32 %v235, 4294901760
    %237 = vmatpush1.msra.mxu0 %v236
    %238 = vmatprep.subr.mxu0 0.0
    %v239 = vand.u32 %v26, 4294901760
    %v240 = vsub.f32 %v26, %v239
    %v241 = vand.u32 %v240, 4294901760
    %v242 = vsub.f32 %v240, %v241
    %v243 = vand.u32 %v242, 4294901760
    %244 = vmatpush1.msra.mxu0 %v243
    %245 = vmatprep.subr.mxu0 0.0
    %246 = vmatpush2.msra.mxu0 0.0
    %247 = vmatprep.subr.mxu0 0.0
    %248 = vmatpush2.msra.mxu0 0.0
    %249 = vmatprep.subr.mxu0 0.0
    %250 = vmatpush2.msra.mxu0 0.0
    %251 = vmatprep.subr.mxu0 0.0
    %252 = vmatpush2.msra.mxu0 0.0
    %253 = vmatprep.subr.mxu0 0.0
    %254 = vmatpush2.msra.mxu0 0.0
    %255 = vmatprep.subr.mxu0 0.0
    %256 = vmatpush2.msra.mxu0 0.0
    %257 = vmatprep.subr.mxu0 0.0
    %258 = vmatpush2.msra.mxu0 0.0
    %259 = vmatprep.subr.mxu0 0.0
    %260 = vmatpush2.msra.mxu0 0.0
    %261 = vmatprep.subr.mxu0 0.0
    %262 = vmatpush2.msra.mxu0 0.0
    %263 = vmatprep.subr.mxu0 0.0
    %264 = vmatpush2.msra.mxu0 0.0
    %265 = vmatprep.subr.mxu0 0.0
    %266 = vmatpush2.msra.mxu0 0.0
    %267 = vmatprep.subr.mxu0 0.0
    %268 = vmatpush2.msra.mxu0 0.0
    %269 = vmatprep.subr.mxu0 0.0
    %270 = vmatpush2.msra.mxu0 0.0
    %271 = vmatprep.subr.mxu0 0.0
    %272 = vmatpush2.msra.mxu0 0.0
    %273 = vmatprep.subr.mxu0 0.0
    %274 = vmatpush2.msra.mxu0 0.0
    %275 = vmatprep.subr.mxu0 0.0
    %276 = vmatpush2.msra.mxu0 0.0
    %277 = vmatprep.mubr.f32.mxu0 0.0
    %v278 = vand.u32 %v25, 4294901760
    %279 = vmatmul.mubr.f32.gmra.mxu0 %v278
    %v280 = vpop.f32.mrf.mxu0
    %v281 = vadd.f32 %v130, %v280
    %v282 = vpop.f32.mrf.mxu0
    %283 = vdwg.mxu0
    %284 = vmatprep.subr.mxu0 0.0
    %v285 = vand.u32 %v41, 4294901760
    %v286 = vsub.f32 %v41, %v285
    %287 = vmatpush1.msra.mxu0 %v286
    %288 = vmatprep.subr.mxu0 0.0
    %v289 = vand.u32 %v40, 4294901760
    %v290 = vsub.f32 %v40, %v289
    %291 = vmatpush1.msra.mxu0 %v290
    %292 = vmatprep.subr.mxu0 0.0
    %v293 = vand.u32 %v39, 4294901760
    %v294 = vsub.f32 %v39, %v293
    %295 = vmatpush1.msra.mxu0 %v294
    %296 = vmatprep.subr.mxu0 0.0
    %v297 = vand.u32 %v38, 4294901760
    %v298 = vsub.f32 %v38, %v297
    %299 = vmatpush1.msra.mxu0 %v298
    %300 = vmatprep.subr.mxu0 0.0
    %v301 = vand.u32 %v37, 4294901760
    %v302 = vsub.f32 %v37, %v301
    %303 = vmatpush1.msra.mxu0 %v302
    %304 = vmatprep.subr.mxu0 0.0
    %v305 = vand.u32 %v36, 4294901760
    %v306 = vsub.f32 %v36, %v305
    %307 = vmatpush1.msra.mxu0 %v306
    %308 = vmatprep.subr.mxu0 0.0
    %v309 = vand.u32 %v35, 4294901760
    %v310 = vsub.f32 %v35, %v309
    %311 = vmatpush1.msra.mxu0 %v310
    %312 = vmatprep.subr.mxu0 0.0
    %v313 = vand.u32 %v34, 4294901760
    %v314 = vsub.f32 %v34, %v313
    %315 = vmatpush1.msra.mxu0 %v314
    %316 = vmatprep.subr.mxu0 0.0
    %v317 = vand.u32 %v33, 4294901760
    %v318 = vsub.f32 %v33, %v317
    %319 = vmatpush1.msra.mxu0 %v318
    %320 = vmatprep.subr.mxu0 0.0
    %v321 = vand.u32 %v32, 4294901760
    %v322 = vsub.f32 %v32, %v321
    %323 = vmatpush1.msra.mxu0 %v322
    %324 = vmatprep.subr.mxu0 0.0
    %v325 = vand.u32 %v31, 4294901760
    %v326 = vsub.f32 %v31, %v325
    %327 = vmatpush1.msra.mxu0 %v326
    %328 = vmatprep.subr.mxu0 0.0
    %v329 = vand.u32 %v30, 4294901760
    %v330 = vsub.f32 %v30, %v329
    %331 = vmatpush1.msra.mxu0 %v330
    %332 = vmatprep.subr.mxu0 0.0
    %v333 = vand.u32 %v29, 4294901760
    %v334 = vsub.f32 %v29, %v333
    %335 = vmatpush1.msra.mxu0 %v334
    %336 = vmatprep.subr.mxu0 0.0
    %v337 = vand.u32 %v28, 4294901760
    %v338 = vsub.f32 %v28, %v337
    %339 = vmatpush1.msra.mxu0 %v338
    %340 = vmatprep.subr.mxu0 0.0
    %v341 = vand.u32 %v27, 4294901760
    %v342 = vsub.f32 %v27, %v341
    %343 = vmatpush1.msra.mxu0 %v342
    %344 = vmatprep.subr.mxu0 0.0
    %v345 = vand.u32 %v26, 4294901760
    %v346 = vsub.f32 %v26, %v345
    %347 = vmatpush1.msra.mxu0 %v346
    %348 = vmatprep.subr.mxu0 0.0
    %349 = vmatpush2.msra.mxu0 0.0
    %350 = vmatprep.subr.mxu0 0.0
    %351 = vmatpush2.msra.mxu0 0.0
    %352 = vmatprep.subr.mxu0 0.0
    %353 = vmatpush2.msra.mxu0 0.0
    %354 = vmatprep.subr.mxu0 0.0
    %355 = vmatpush2.msra.mxu0 0.0
    %356 = vmatprep.subr.mxu0 0.0
    %357 = vmatpush2.msra.mxu0 0.0
    %358 = vmatprep.subr.mxu0 0.0
    %359 = vmatpush2.msra.mxu0 0.0
    %360 = vmatprep.subr.mxu0 0.0
    %361 = vmatpush2.msra.mxu0 0.0
    %362 = vmatprep.subr.mxu0 0.0
    %363 = vmatpush2.msra.mxu0 0.0
    %364 = vmatprep.subr.mxu0 0.0
    %365 = vmatpush2.msra.mxu0 0.0
    %366 = vmatprep.subr.mxu0 0.0
    %367 = vmatpush2.msra.mxu0 0.0
    %368 = vmatprep.subr.mxu0 0.0
    %369 = vmatpush2.msra.mxu0 0.0
    %370 = vmatprep.subr.mxu0 0.0
    %371 = vmatpush2.msra.mxu0 0.0
    %372 = vmatprep.subr.mxu0 0.0
    %373 = vmatpush2.msra.mxu0 0.0
    %374 = vmatprep.subr.mxu0 0.0
    %375 = vmatpush2.msra.mxu0 0.0
    %376 = vmatprep.subr.mxu0 0.0
    %377 = vmatpush2.msra.mxu0 0.0
    %378 = vmatprep.subr.mxu0 0.0
    %379 = vmatpush2.msra.mxu0 0.0
    %380 = vmatprep.mubr.f32.mxu0 0.0
    %v381 = vand.u32 %v25, 4294901760
    %v382 = vsub.f32 %v25, %v381
    %383 = vmatmul.mubr.f32.gmra.mxu0 %v382
    %v384 = vpop.f32.mrf.mxu0
    %v385 = vadd.f32 %v281, %v384
    %v386 = vpop.f32.mrf.mxu0
    %387 = vdwg.mxu0
    %388 = vmatprep.subr.mxu0 0.0
    %v389 = vand.u32 %v41, 4294901760
    %390 = vmatpush1.msra.mxu0 %v389
    %391 = vmatprep.subr.mxu0 0.0
    %v392 = vand.u32 %v40, 4294901760
    %393 = vmatpush1.msra.mxu0 %v392
    %394 = vmatprep.subr.mxu0 0.0
    %v395 = vand.u32 %v39, 4294901760
    %396 = vmatpush1.msra.mxu0 %v395
    %397 = vmatprep.subr.mxu0 0.0
    %v398 = vand.u32 %v38, 4294901760
    %399 = vmatpush1.msra.mxu0 %v398
    %400 = vmatprep.subr.mxu0 0.0
    %v401 = vand.u32 %v37, 4294901760
    %402 = vmatpush1.msra.mxu0 %v401
    %403 = vmatprep.subr.mxu0 0.0
    %v404 = vand.u32 %v36, 4294901760
    %405 = vmatpush1.msra.mxu0 %v404
    %406 = vmatprep.subr.mxu0 0.0
    %v407 = vand.u32 %v35, 4294901760
    %408 = vmatpush1.msra.mxu0 %v407
    %409 = vmatprep.subr.mxu0 0.0
    %v410 = vand.u32 %v34, 4294901760
    %411 = vmatpush1.msra.mxu0 %v410
    %412 = vmatprep.subr.mxu0 0.0
    %v413 = vand.u32 %v33, 4294901760
    %414 = vmatpush1.msra.mxu0 %v413
    %415 = vmatprep.subr.mxu0 0.0
    %v416 = vand.u32 %v32, 4294901760
    %417 = vmatpush1.msra.mxu0 %v416
    %418 = vmatprep.subr.mxu0 0.0
    %v419 = vand.u32 %v31, 4294901760
    %420 = vmatpush1.msra.mxu0 %v419
    %421 = vmatprep.subr.mxu0 0.0
    %v422 = vand.u32 %v30, 4294901760
    %423 = vmatpush1.msra.mxu0 %v422
    %424 = vmatprep.subr.mxu0 0.0
    %v425 = vand.u32 %v29, 4294901760
    %426 = vmatpush1.msra.mxu0 %v425
    %427 = vmatprep.subr.mxu0 0.0
    %v428 = vand.u32 %v28, 4294901760
    %429 = vmatpush1.msra.mxu0 %v428
    %430 = vmatprep.subr.mxu0 0.0
    %v431 = vand.u32 %v27, 4294901760
    %432 = vmatpush1.msra.mxu0 %v431
    %433 = vmatprep.subr.mxu0 0.0
    %v434 = vand.u32 %v26, 4294901760
    %435 = vmatpush1.msra.mxu0 %v434
    %436 = vmatprep.subr.mxu0 0.0
    %437 = vmatpush2.msra.mxu0 0.0
    %438 = vmatprep.subr.mxu0 0.0
    %439 = vmatpush2.msra.mxu0 0.0
    %440 = vmatprep.subr.mxu0 0.0
    %441 = vmatpush2.msra.mxu0 0.0
    %442 = vmatprep.subr.mxu0 0.0
    %443 = vmatpush2.msra.mxu0 0.0
    %444 = vmatprep.subr.mxu0 0.0
    %445 = vmatpush2.msra.mxu0 0.0
    %446 = vmatprep.subr.mxu0 0.0
    %447 = vmatpush2.msra.mxu0 0.0
    %448 = vmatprep.subr.mxu0 0.0
    %449 = vmatpush2.msra.mxu0 0.0
    %450 = vmatprep.subr.mxu0 0.0
    %451 = vmatpush2.msra.mxu0 0.0
    %452 = vmatprep.subr.mxu0 0.0
    %453 = vmatpush2.msra.mxu0 0.0
    %454 = vmatprep.subr.mxu0 0.0
    %455 = vmatpush2.msra.mxu0 0.0
    %456 = vmatprep.subr.mxu0 0.0
    %457 = vmatpush2.msra.mxu0 0.0
    %458 = vmatprep.subr.mxu0 0.0
    %459 = vmatpush2.msra.mxu0 0.0
    %460 = vmatprep.subr.mxu0 0.0
    %461 = vmatpush2.msra.mxu0 0.0
    %462 = vmatprep.subr.mxu0 0.0
    %463 = vmatpush2.msra.mxu0 0.0
    %464 = vmatprep.subr.mxu0 0.0
    %465 = vmatpush2.msra.mxu0 0.0
    %466 = vmatprep.subr.mxu0 0.0
    %467 = vmatpush2.msra.mxu0 0.0
    %468 = vmatprep.mubr.f32.mxu0 0.0
    %v469 = vand.u32 %v25, 4294901760
    %v470 = vsub.f32 %v25, %v469
    %v471 = vand.u32 %v470, 4294901760
    %472 = vmatmul.mubr.f32.gmra.mxu0 %v471
    %v473 = vpop.f32.mrf.mxu0
    %v474 = vadd.f32 %v385, %v473
    %v475 = vpop.f32.mrf.mxu0
    %476 = vdwg.mxu0
    %477 = vmatprep.subr.mxu0 0.0
    %v478 = vand.u32 %v41, 4294901760
    %v479 = vsub.f32 %v41, %v478
    %v480 = vand.u32 %v479, 4294901760
    %481 = vmatpush1.msra.mxu0 %v480
    %482 = vmatprep.subr.mxu0 0.0
    %v483 = vand.u32 %v40, 4294901760
    %v484 = vsub.f32 %v40, %v483
    %v485 = vand.u32 %v484, 4294901760
    %486 = vmatpush1.msra.mxu0 %v485
    %487 = vmatprep.subr.mxu0 0.0
    %v488 = vand.u32 %v39, 4294901760
    %v489 = vsub.f32 %v39, %v488
    %v490 = vand.u32 %v489, 4294901760
    %491 = vmatpush1.msra.mxu0 %v490
    %492 = vmatprep.subr.mxu0 0.0
    %v493 = vand.u32 %v38, 4294901760
    %v494 = vsub.f32 %v38, %v493
    %v495 = vand.u32 %v494, 4294901760
    %496 = vmatpush1.msra.mxu0 %v495
    %497 = vmatprep.subr.mxu0 0.0
    %v498 = vand.u32 %v37, 4294901760
    %v499 = vsub.f32 %v37, %v498
    %v500 = vand.u32 %v499, 4294901760
    %501 = vmatpush1.msra.mxu0 %v500
    %502 = vmatprep.subr.mxu0 0.0
    %v503 = vand.u32 %v36, 4294901760
    %v504 = vsub.f32 %v36, %v503
    %v505 = vand.u32 %v504, 4294901760
    %506 = vmatpush1.msra.mxu0 %v505
    %507 = vmatprep.subr.mxu0 0.0
    %v508 = vand.u32 %v35, 4294901760
    %v509 = vsub.f32 %v35, %v508
    %v510 = vand.u32 %v509, 4294901760
    %511 = vmatpush1.msra.mxu0 %v510
    %512 = vmatprep.subr.mxu0 0.0
    %v513 = vand.u32 %v34, 4294901760
    %v514 = vsub.f32 %v34, %v513
    %v515 = vand.u32 %v514, 4294901760
    %516 = vmatpush1.msra.mxu0 %v515
    %517 = vmatprep.subr.mxu0 0.0
    %v518 = vand.u32 %v33, 4294901760
    %v519 = vsub.f32 %v33, %v518
    %v520 = vand.u32 %v519, 4294901760
    %521 = vmatpush1.msra.mxu0 %v520
    %522 = vmatprep.subr.mxu0 0.0
    %v523 = vand.u32 %v32, 4294901760
    %v524 = vsub.f32 %v32, %v523
    %v525 = vand.u32 %v524, 4294901760
    %526 = vmatpush1.msra.mxu0 %v525
    %527 = vmatprep.subr.mxu0 0.0
    %v528 = vand.u32 %v31, 4294901760
    %v529 = vsub.f32 %v31, %v528
    %v530 = vand.u32 %v529, 4294901760
    %531 = vmatpush1.msra.mxu0 %v530
    %532 = vmatprep.subr.mxu0 0.0
    %v533 = vand.u32 %v30, 4294901760
    %v534 = vsub.f32 %v30, %v533
    %v535 = vand.u32 %v534, 4294901760
    %536 = vmatpush1.msra.mxu0 %v535
    %537 = vmatprep.subr.mxu0 0.0
    %v538 = vand.u32 %v29, 4294901760
    %v539 = vsub.f32 %v29, %v538
    %v540 = vand.u32 %v539, 4294901760
    %541 = vmatpush1.msra.mxu0 %v540
    %542 = vmatprep.subr.mxu0 0.0
    %v543 = vand.u32 %v28, 4294901760
    %v544 = vsub.f32 %v28, %v543
    %v545 = vand.u32 %v544, 4294901760
    %546 = vmatpush1.msra.mxu0 %v545
    %547 = vmatprep.subr.mxu0 0.0
    %v548 = vand.u32 %v27, 4294901760
    %v549 = vsub.f32 %v27, %v548
    %v550 = vand.u32 %v549, 4294901760
    %551 = vmatpush1.msra.mxu0 %v550
    %552 = vmatprep.subr.mxu0 0.0
    %v553 = vand.u32 %v26, 4294901760
    %v554 = vsub.f32 %v26, %v553
    %v555 = vand.u32 %v554, 4294901760
    %556 = vmatpush1.msra.mxu0 %v555
    %557 = vmatprep.subr.mxu0 0.0
    %558 = vmatpush2.msra.mxu0 0.0
    %559 = vmatprep.subr.mxu0 0.0
    %560 = vmatpush2.msra.mxu0 0.0
    %561 = vmatprep.subr.mxu0 0.0
    %562 = vmatpush2.msra.mxu0 0.0
    %563 = vmatprep.subr.mxu0 0.0
    %564 = vmatpush2.msra.mxu0 0.0
    %565 = vmatprep.subr.mxu0 0.0
    %566 = vmatpush2.msra.mxu0 0.0
    %567 = vmatprep.subr.mxu0 0.0
    %568 = vmatpush2.msra.mxu0 0.0
    %569 = vmatprep.subr.mxu0 0.0
    %570 = vmatpush2.msra.mxu0 0.0
    %571 = vmatprep.subr.mxu0 0.0
    %572 = vmatpush2.msra.mxu0 0.0
    %573 = vmatprep.subr.mxu0 0.0
    %574 = vmatpush2.msra.mxu0 0.0
    %575 = vmatprep.subr.mxu0 0.0
    %576 = vmatpush2.msra.mxu0 0.0
    %577 = vmatprep.subr.mxu0 0.0
    %578 = vmatpush2.msra.mxu0 0.0
    %579 = vmatprep.subr.mxu0 0.0
    %580 = vmatpush2.msra.mxu0 0.0
    %581 = vmatprep.subr.mxu0 0.0
    %582 = vmatpush2.msra.mxu0 0.0
    %583 = vmatprep.subr.mxu0 0.0
    %584 = vmatpush2.msra.mxu0 0.0
    %585 = vmatprep.subr.mxu0 0.0
    %586 = vmatpush2.msra.mxu0 0.0
    %587 = vmatprep.subr.mxu0 0.0
    %588 = vmatpush2.msra.mxu0 0.0
    %589 = vmatprep.mubr.f32.mxu0 0.0
    %v590 = vand.u32 %v25, 4294901760
    %591 = vmatmul.mubr.f32.gmra.mxu0 %v590
    %v592 = vpop.f32.mrf.mxu0
    %v593 = vadd.f32 %v474, %v592
    %v594 = vpop.f32.mrf.mxu0
    %595 = vdwg.mxu0
    %596 = vmatprep.subr.mxu0 0.0
    %v597 = vand.u32 %v41, 4294901760
    %598 = vmatpush1.msra.mxu0 %v597
    %599 = vmatprep.subr.mxu0 0.0
    %v600 = vand.u32 %v40, 4294901760
    %601 = vmatpush1.msra.mxu0 %v600
    %602 = vmatprep.subr.mxu0 0.0
    %v603 = vand.u32 %v39, 4294901760
    %604 = vmatpush1.msra.mxu0 %v603
    %605 = vmatprep.subr.mxu0 0.0
    %v606 = vand.u32 %v38, 4294901760
    %607 = vmatpush1.msra.mxu0 %v606
    %608 = vmatprep.subr.mxu0 0.0
    %v609 = vand.u32 %v37, 4294901760
    %610 = vmatpush1.msra.mxu0 %v609
    %611 = vmatprep.subr.mxu0 0.0
    %v612 = vand.u32 %v36, 4294901760
    %613 = vmatpush1.msra.mxu0 %v612
    %614 = vmatprep.subr.mxu0 0.0
    %v615 = vand.u32 %v35, 4294901760
    %616 = vmatpush1.msra.mxu0 %v615
    %617 = vmatprep.subr.mxu0 0.0
    %v618 = vand.u32 %v34, 4294901760
    %619 = vmatpush1.msra.mxu0 %v618
    %620 = vmatprep.subr.mxu0 0.0
    %v621 = vand.u32 %v33, 4294901760
    %622 = vmatpush1.msra.mxu0 %v621
    %623 = vmatprep.subr.mxu0 0.0
    %v624 = vand.u32 %v32, 4294901760
    %625 = vmatpush1.msra.mxu0 %v624
    %626 = vmatprep.subr.mxu0 0.0
    %v627 = vand.u32 %v31, 4294901760
    %628 = vmatpush1.msra.mxu0 %v627
    %629 = vmatprep.subr.mxu0 0.0
    %v630 = vand.u32 %v30, 4294901760
    %631 = vmatpush1.msra.mxu0 %v630
    %632 = vmatprep.subr.mxu0 0.0
    %v633 = vand.u32 %v29, 4294901760
    %634 = vmatpush1.msra.mxu0 %v633
    %635 = vmatprep.subr.mxu0 0.0
    %v636 = vand.u32 %v28, 4294901760
    %637 = vmatpush1.msra.mxu0 %v636
    %638 = vmatprep.subr.mxu0 0.0
    %v639 = vand.u32 %v27, 4294901760
    %640 = vmatpush1.msra.mxu0 %v639
    %641 = vmatprep.subr.mxu0 0.0
    %v642 = vand.u32 %v26, 4294901760
    %643 = vmatpush1.msra.mxu0 %v642
    %644 = vmatprep.subr.mxu0 0.0
    %645 = vmatpush2.msra.mxu0 0.0
    %646 = vmatprep.subr.mxu0 0.0
    %647 = vmatpush2.msra.mxu0 0.0
    %648 = vmatprep.subr.mxu0 0.0
    %649 = vmatpush2.msra.mxu0 0.0
    %650 = vmatprep.subr.mxu0 0.0
    %651 = vmatpush2.msra.mxu0 0.0
    %652 = vmatprep.subr.mxu0 0.0
    %653 = vmatpush2.msra.mxu0 0.0
    %654 = vmatprep.subr.mxu0 0.0
    %655 = vmatpush2.msra.mxu0 0.0
    %656 = vmatprep.subr.mxu0 0.0
    %657 = vmatpush2.msra.mxu0 0.0
    %658 = vmatprep.subr.mxu0 0.0
    %659 = vmatpush2.msra.mxu0 0.0
    %660 = vmatprep.subr.mxu0 0.0
    %661 = vmatpush2.msra.mxu0 0.0
    %662 = vmatprep.subr.mxu0 0.0
    %663 = vmatpush2.msra.mxu0 0.0
    %664 = vmatprep.subr.mxu0 0.0
    %665 = vmatpush2.msra.mxu0 0.0
    %666 = vmatprep.subr.mxu0 0.0
    %667 = vmatpush2.msra.mxu0 0.0
    %668 = vmatprep.subr.mxu0 0.0
    %669 = vmatpush2.msra.mxu0 0.0
    %670 = vmatprep.subr.mxu0 0.0
    %671 = vmatpush2.msra.mxu0 0.0
    %672 = vmatprep.subr.mxu0 0.0
    %673 = vmatpush2.msra.mxu0 0.0
    %674 = vmatprep.subr.mxu0 0.0
    %675 = vmatpush2.msra.mxu0 0.0
    %676 = vmatprep.mubr.f32.mxu0 0.0
    %v677 = vand.u32 %v25, 4294901760
    %678 = vmatmul.mubr.f32.gmra.mxu0 %v677
    %v679 = vpop.f32.mrf.mxu0
    %v680 = vadd.f32 %v593, %v679
    %v681 = vpop.f32.mrf.mxu0
    %682 = vdwg.mxu0
    %683 = vst [vmem:[%s2] sm:$0x3] %v680
    // Predicated region
    $region14: #{shuffle_pallas.1} parent=1 // pred_check
      _
    $region15: #{shuffle_pallas.1} parent=1 // pred_check_branch
      %685 = sbr.rel (0) target = $region17
    $region16: #{shuffle_pallas.1} parent=1 // pred_region
      _
    $region17: #{shuffle_pallas.1} parent=1 // pred_fallthru
      _
    // Predicated region
    $region18: #{shuffle_pallas.1} parent=1 // pred_check
      _
    $region19: #{shuffle_pallas.1} parent=1 // pred_check_branch
      %687 = sbr.rel (0) target = $region21
    $region20: #{shuffle_pallas.1} parent=1 // pred_region
      _
    $region21: #{shuffle_pallas.1} parent=1 // pred_fallthru
      _
    %688 = vsyncpa [#allocation3], 1

</llo_original>
